<compile_context>
chip_gen: v7x
topology: tpu7x:2x2x1
jax: 0.10.0
libtpu: 0.0.40
codegen_flags: <defaults>
</compile_context>

<pallas_src>
import jax
import jax.numpy as jnp
import numpy as np
from jax.experimental import pallas as pl
from jax.experimental.pallas import tpu as pltpu


_WSLAB_LANES = 256   # lane width of the packed bf16 weight slab
_BSLAB_ROWS = 8      # rows of the packed f32 bias slab (one bias vector per row)


# ---------------------------------------------------------------------------
# Slab layout (shared by host packing and kernel static slices)
# ---------------------------------------------------------------------------
def _weight_slab_layout(feature_dim):
    """Row offsets (16-aligned, bf16-tile friendly) of each fused weight."""
    up16 = lambda n: ((n + 15) // 16) * 16
    entries = [
        ("w01", feature_dim + 1),  # table_fc_0 | rl_table_fc_0 (+ zero mask row)
        ("w12", 256),              # block-diag table_fc_1 | rl_table_fc_1
        ("wh0", 64),               # fused fwd/com/bwd first layers (rl half zero)
        ("whc", 192),              # head fc_1 + cost_fc_0 channel-combine
        ("wc1", 64),               # cost_fc_1
        ("wpp", 2),                # policy rows: [0_32 | wp[:32]^T], wp[32:]^T
    ]
    offs, row = {}, 0
    for name, rows in entries:
        offs[name] = row
        row += up16(rows)
    return offs, row


# ---------------------------------------------------------------------------
# Kernel
# ---------------------------------------------------------------------------
def _make_policy_kernel(feature_dim, tables_per_segment, segments_per_block, woffs):
    F, T, G = feature_dim, tables_per_segment, segments_per_block
    Fp = F + 1
    o01, o12 = woffs["w01"], woffs["w12"]
    oh0, ohc = woffs["wh0"], woffs["whc"]
    oc1, opp = woffs["wc1"], woffs["wpp"]

    def kernel(xm_ref, w_ref, b_ref, out_ref):
        relu = lambda v: jnp.maximum(v, 0.0)
        bf16 = jnp.bfloat16
        dot = lambda a, b: jnp.dot(a, b, preferred_element_type=jnp.float32)
        # A @ B^T ('gd,kd->gk'): emits the lane-dense (1, G) policy row directly.
        dot_bt = lambda a, b: jax.lax.dot_general(
            a, b, (((1,), (1,)), ((), ())), preferred_element_type=jnp.float32)

        # Rows for this block of segments; validity mask folded in as column F
        # (its weight row inside w01 is zero).  f32 in HBM, bf16 cast on the VPU.
        xm = xm_ref[...]                         # (TN, F+1) f32
        x = xm.astype(bf16)
        mask = xm[:, F:F + 1]                    # (TN, 1) 0/1 validity

        # Static slab slices (zero-cost ref views -> vector loads).
        w01 = w_ref[o01:o01 + Fp, :]             # (F+1, 256) bf16
        w12 = w_ref[o12:o12 + 256, 0:64]         # (256, 64)
        wh0 = w_ref[oh0:oh0 + 64, 0:192]         # (64, 192)
        whc = w_ref[ohc:ohc + 192, 0:64]         # (192, 64)
        wc1 = w_ref[oc1:oc1 + 64, 0:32]          # (64, 32)
        wpt = w_ref[opp:opp + 1, 0:64]           # (1, 64) policy weights on ts
        wpc = w_ref[opp + 1:opp + 2, 0:32]       # (1, 32) policy weights on cost

        b01 = b_ref[0:1, :]                      # (1, 256) f32
        b12 = b_ref[1:2, 0:64]
        bh0 = b_ref[2:3, 0:192]
        bhc = b_ref[3:4, 0:64]
        bc1 = b_ref[4:5, 0:32]
        bp = b_ref[5:6, 0:1]

        # Fused first + second table layers (cols 0:32 table path, 32:64 rl path).
        h1 = relu(dot(x, w01) + b01)                               # (TN, 256) f32
        h2 = relu(dot(h1.astype(bf16), w12) + b12)                 # (TN, 64)  f32

        # Ragged segment-sum (torch index_add_): zero the padded rows, then a
        # sublane reshape-reduce.  No O(G^2*T) segment matrix, no MXU use.
        hm = h2 * mask                                             # (TN, 64)
        ts = jnp.sum(hm.reshape(G, T, 64), axis=1)                 # (G, 64)
        tsb = ts.astype(bf16)
        # ts[:, 0:32] = table latent (cost heads), ts[:, 32:64] = rl latent.

        # Three cost heads' first layers in one matmul (rl half of wh0 is zero).
        z = relu(dot(tsb, wh0) + bh0)                              # (G, 192)
        # Head second layers + cost_fc_0 channel combine (exact algebra,
        # channel order [fwd, com, bwd] per torch _get_latent unpacking).
        c = relu(dot(z.astype(bf16), whc) + bhc)                   # (G, 64)
        # cost_fc_1.
        c = relu(dot(c.astype(bf16), wc1) + bc1)                   # (G, 32)

        # policy_net on [rl latent | cost latent], stored lane-dense as (1, G).
        out_row = dot_bt(wpt, tsb) + dot_bt(wpc, c.astype(bf16)) + bp
        out_ref[...] = out_row.reshape(1, 1, G)

    return kernel


# ---------------------------------------------------------------------------
# Wrapper
# ---------------------------------------------------------------------------
def _choose_segments_per_block(num_segments, tables_per_segment, target_rows):
    g = max(1, min(num_segments, target_rows // tables_per_segment))
    while num_segments % g:
        g -= 1
    return g


def model_policy_forward(xm, wslab, bslab, *, num_segments, tables_per_segment,
                         segments_per_block=None, target_rows_per_step=1024):
    """xm: (N, F+1) f32 rows with validity mask as column F; N = M * T."""
    N, Fp = xm.shape
    F = Fp - 1
    M, T = num_segments, tables_per_segment
    assert N == M * T, "rows must be padded to num_segments * tables_per_segment"
    assert T % 8 == 0, "tables_per_segment must be padded to a multiple of 8"
    if segments_per_block is None:
        segments_per_block = _choose_segments_per_block(M, T, target_rows_per_step)
    G = segments_per_block
    assert M % G == 0, "num_segments must be a multiple of segments_per_block"
    TN = G * T
    nb = M // G

    woffs, wrows = _weight_slab_layout(F)
    assert wslab.shape == (wrows, _WSLAB_LANES) and bslab.shape == (_BSLAB_ROWS, _WSLAB_LANES)
    kernel = _make_policy_kernel(F, T, G, woffs)

    in_specs = [
        pl.BlockSpec((TN, Fp), lambda i: (i, 0)),        # rows of this segment block
        pl.BlockSpec(wslab.shape, lambda i: (0, 0)),     # weight slab: DMA'd once
        pl.BlockSpec(bslab.shape, lambda i: (0, 0)),     # bias slab:   DMA'd once
    ]
    out_specs = pl.BlockSpec((1, 1, G), lambda i: (i, 0, 0))   # lane-dense output

    # Advisory cost estimate for the XLA scheduler.
    flops = 2 * (N * Fp * 256 + N * 256 * 64
                 + M * (64 * 192 + 192 * 64 + 64 * 32 + 64 + 32)) + N * 64
    bytes_accessed = (N * Fp * 4 + int(wslab.size) * 2 + int(bslab.size) * 4 + M * 4)

    out = pl.pallas_call(
        kernel,
        out_shape=jax.ShapeDtypeStruct((nb, 1, G), jnp.float32),
        grid_spec=pltpu.PrefetchScalarGridSpec(
            num_scalar_prefetch=0,
            grid=(nb,),
            in_specs=in_specs,
            out_specs=out_specs,
        ),
        compiler_params=pltpu.CompilerParams(
            dimension_semantics=("parallel",),        # megacore sharding when nb > 1
            vmem_limit_bytes=32 * 1024 * 1024,        # fits v5e/v6e/v7x comfortably
        ),
        cost_estimate=pl.CostEstimate(
            flops=int(flops), transcendentals=0, bytes_accessed=int(bytes_accessed)),
    )(xm, wslab, bslab)
    return out.reshape(M)


# ---------------------------------------------------------------------------
# Parameters (synthetic, nn.Linear-shaped) and host-side fusion into 2 slabs
# ---------------------------------------------------------------------------
def make_params(key, feature_dim):
    """Deterministic synthetic parameters matching the nn.Linear shapes (in, out)."""
    lat = 32
    shapes = [
        (feature_dim, 128), (1, 128), (128, lat), (1, lat),   # table_fc_0/1
        (feature_dim, 128), (1, 128), (128, lat), (1, lat),   # rl_table_fc_0/1
        (lat, 64), (1, 64), (64, 1), (1, 1),                  # forward_fc_0/1
        (lat, 64), (1, 64), (64, 1), (1, 1),                  # communication_fc_0/1
        (lat, 64), (1, 64), (64, 1), (1, 1),                  # backward_fc_0/1
        (3, 64), (1, 64), (64, lat), (1, lat),                # cost_fc_0/1
        (2 * lat, 1), (1, 1),                                 # policy_net
    ]
    keys = jax.random.split(key, len(shapes))
    params = []
    for k, shp in zip(keys, shapes):
        fan_in = shp[0] if shp[0] > 1 else shp[1]
        scale = 1.0 / np.sqrt(max(fan_in, 1))
        params.append(jax.random.uniform(k, shp, jnp.float32, -scale, scale))
    return tuple(params)


def fuse_params(p, feature_dim):
    """Algebraically fuse the 26 raw tensors into one bf16 weight slab + one f32 bias slab."""
    (wt0, bt0, wt1, bt1, wr0, br0, wr1, br1,
     wf0, bf0, wf1, bf1, wcm0, bcm0, wcm1, bcm1, wbw0, bbw0, wbw1, bbw1,
     wc0, bc0, wc1, bc1, wp, bp) = p
    f32 = jnp.float32
    F = feature_dim
    offs, total_rows = _weight_slab_layout(F)
    wslab = jnp.zeros((total_rows, _WSLAB_LANES), f32)

    # First layer: [table_fc_0 | rl_table_fc_0] -> (F, 256); row F (mask column)
    # stays zero so the folded-in validity mask does not perturb h1.
    o = offs["w01"]
    wslab = wslab.at[o:o + F, 0:256].set(jnp.concatenate([wt0, wr0], axis=1))

    # Second layer: block-diag so cols 0:32 = table path, 32:64 = rl path.
    o = offs["w12"]
    wslab = wslab.at[o:o + 128, 0:32].set(wt1)
    wslab = wslab.at[o + 128:o + 256, 32:64].set(wr1)

    # Head first layers (32, 192); rows 32:64 stay zero so the rl half of the
    # fused segment-sum contributes nothing (avoids lane slicing in-kernel).
    o = offs["wh0"]
    wslab = wslab.at[o:o + 32, 0:192].set(jnp.concatenate([wf0, wcm0, wbw0], axis=1))

    # Head second layers + cost_fc_0 channel combine.  torch kernel_forward
    # returns (fwd, com, bwd); _get_latent's local-name unpack keeps channel
    # order [fwd, com, bwd] into cost_fc_0 -> wc0 rows 0/1/2.
    o = offs["whc"]
    whc = jnp.concatenate(
        [wf1 @ wc0[0:1, :], wcm1 @ wc0[1:2, :], wbw1 @ wc0[2:3, :]], axis=0)  # (192, 64)
    wslab = wslab.at[o:o + 192, 0:64].set(whc)

    o = offs["wc1"]
    wslab = wslab.at[o:o + 64, 0:32].set(wc1)

    # policy_net on [rl_table_latent (ts cols 32:64) | cost_latent]:
    # row 0: zero weights on the table half, wp[:32] on the rl half (over ts).
    # row 1: wp[32:] over the cost latent.
    o = offs["wpp"]
    wslab = wslab.at[o, 32:64].set(wp[0:32, 0])
    wslab = wslab.at[o + 1, 0:32].set(wp[32:64, 0])
    wslab = wslab.astype(jnp.bfloat16)

    # Bias slab (f32), one fused bias vector per row.
    bslab = jnp.zeros((_BSLAB_ROWS, _WSLAB_LANES), f32)
    bslab = bslab.at[0, 0:256].set(jnp.concatenate([bt0, br0], axis=1)[0])
    bslab = bslab.at[1, 0:64].set(jnp.concatenate([bt1, br1], axis=1)[0])
    bslab = bslab.at[2, 0:192].set(jnp.concatenate([bf0, bcm0, bbw0], axis=1)[0])
    bhc = bf1 @ wc0[0:1, :] + bcm1 @ wc0[1:2, :] + bbw1 @ wc0[2:3, :] + bc0
    bslab = bslab.at[3, 0:64].set(bhc[0])
    bslab = bslab.at[4, 0:32].set(bc1[0])
    bslab = bslab.at[5, 0].set(bp[0, 0])
    return wslab, bslab


# ---------------------------------------------------------------------------
# Pure-JAX reference mirroring the torch forward pass (f32, unfused).
# ---------------------------------------------------------------------------
def reference_forward(x_rows, row_mask, p, num_segments, tables_per_segment):
    relu = jax.nn.relu
    (wt0, bt0, wt1, bt1, wr0, br0, wr1, br1,
     wf0, bf0, wf1, bf1, wcm0, bcm0, wcm1, bcm1, wbw0, bbw0, wbw1, bbw1,
     wc0, bc0, wc1, bc1, wp, bp) = p
    M, T = num_segments, tables_per_segment

    def segsum(h):  # torch index_add_ over valid rows of each segment
        return (h * row_mask).reshape(M, T, -1).sum(axis=1)

    h = relu(relu(x_rows @ wt0 + bt0) @ wt1 + bt1)
    ts = segsum(h)
    fwd = relu(ts @ wf0 + bf0) @ wf1 + bf1
    com = relu(ts @ wcm0 + bcm0) @ wcm1 + bcm1
    bwd = relu(ts @ wbw0 + bbw0) @ wbw1 + bbw1
    cost = jnp.concatenate([fwd, com, bwd], axis=-1)   # torch channel order
    c = relu(cost @ wc0 + bc0)
    c = relu(c @ wc1 + bc1)
    hr = relu(relu(x_rows @ wr0 + br0) @ wr1 + br1)
    tr = segsum(hr)
    latent = jnp.concatenate([tr, c], axis=-1)
    return latent @ wp + bp


# ---------------------------------------------------------------------------
if __name__ == "__main__":
    # batch B, shards-per-obs D, max tables per (b,d) slot T (8-aligned), feature F
    B, D, T, F = 2, 8, 8, 16
    M, N = B * D, B * D * T

    key = jax.random.PRNGKey(0)
    k_params, k_x = jax.random.split(key)
    raw_params = make_params(k_params, F)
    wslab, bslab = fuse_params(raw_params, F)

    # Deterministic ragged structure: number of valid tables per (b, d) slot.
    lens = ((np.arange(M) % T) + 1).astype(np.int32)                  # (M,)
    row_mask = jnp.asarray(
        (np.arange(T)[None, :] < lens[:, None]).astype(np.float32).reshape(N, 1))
    x_rows = jax.random.normal(k_x, (N, F), jnp.float32)
    # Host-side flatten/pad also appends the validity mask as feature column F.
    xm = jnp.concatenate([x_rows, row_mask], axis=1)                  # (N, F+1)

    out = model_policy_forward(xm, wslab, bslab,
                               num_segments=M, tables_per_segment=T)
    out = jax.block_until_ready(out)
    policy_logits = out.reshape(B, D)   # matches .squeeze(-1) on (B, D, 1)

    ref = reference_forward(x_rows, row_mask, raw_params, M, T).reshape(B, D)
    np.testing.assert_allclose(np.asarray(policy_logits), np.asarray(ref),
                               rtol=5e-2, atol=5e-2)   # bf16 MXU operands, f32 accum
    print("KERNEL_OK")
</pallas_src>

<mosaic_0001>
module attributes {stable_mosaic.version = 11 : i64} {
  func.func @kernel(%arg0: i32, %arg1: memref<128x17xf32, #tpu.memory_space<vmem>>, %arg2: memref<624x256xbf16, #tpu.memory_space<vmem>>, %arg3: memref<8x256xf32, #tpu.memory_space<vmem>>, %arg4: memref<1x1x16xf32, #tpu.memory_space<vmem>>) attributes {dimension_semantics = [#tpu.dimension_semantics<parallel>], iteration_bounds = array<i64: 1>, scalar_prefetch = 0 : i64, scratch_operands = 0 : i64, tpu.core_type = #tpu.core_type<tc>, window_params = [{transform_indices = @transform_0, window_bounds = array<i64: 128, 17>}, {pipeline_mode = #tpu.pipeline_mode<synchronous>, transform_indices = @transform_1, window_bounds = array<i64: 624, 256>}, {pipeline_mode = #tpu.pipeline_mode<synchronous>, transform_indices = @transform_2, window_bounds = array<i64: 8, 256>}, {transform_indices = @transform_3, window_bounds = array<i64: 1, 1, 16>}]} {
    %c0 = arith.constant 0 : index
    %c0_0 = arith.constant 0 : index
    %0 = vector.load %arg1[%c0, %c0_0] : memref<128x17xf32, #tpu.memory_space<vmem>>, vector<128x17xf32>
    %1 = arith.truncf %0 : vector<128x17xf32> to vector<128x17xbf16>
    %2 = vector.extract_strided_slice %0 {offsets = [0, 16], sizes = [128, 1], strides = [1, 1]} : vector<128x17xf32> to vector<128x1xf32>
    %c0_1 = arith.constant 0 : index
    %c0_2 = arith.constant 0 : index
    %3 = vector.load %arg2[%c0_1, %c0_2] : memref<624x256xbf16, #tpu.memory_space<vmem>>, vector<17x256xbf16>
    %c32 = arith.constant 32 : index
    %c0_3 = arith.constant 0 : index
    %4 = vector.load %arg2[%c32, %c0_3] : memref<624x256xbf16, #tpu.memory_space<vmem>>, vector<256x64xbf16>
    %c288 = arith.constant 288 : index
    %c0_4 = arith.constant 0 : index
    %5 = vector.load %arg2[%c288, %c0_4] : memref<624x256xbf16, #tpu.memory_space<vmem>>, vector<64x192xbf16>
    %c352 = arith.constant 352 : index
    %c0_5 = arith.constant 0 : index
    %6 = vector.load %arg2[%c352, %c0_5] : memref<624x256xbf16, #tpu.memory_space<vmem>>, vector<192x64xbf16>
    %c544 = arith.constant 544 : index
    %c0_6 = arith.constant 0 : index
    %7 = vector.load %arg2[%c544, %c0_6] : memref<624x256xbf16, #tpu.memory_space<vmem>>, vector<64x32xbf16>
    %c608 = arith.constant 608 : index
    %c0_7 = arith.constant 0 : index
    %8 = vector.load %arg2[%c608, %c0_7] : memref<624x256xbf16, #tpu.memory_space<vmem>>, vector<1x64xbf16>
    %c609 = arith.constant 609 : index
    %c0_8 = arith.constant 0 : index
    %9 = vector.load %arg2[%c609, %c0_8] : memref<624x256xbf16, #tpu.memory_space<vmem>>, vector<1x32xbf16>
    %c0_9 = arith.constant 0 : index
    %c0_10 = arith.constant 0 : index
    %10 = vector.load %arg3[%c0_9, %c0_10] : memref<8x256xf32, #tpu.memory_space<vmem>>, vector<1x256xf32>
    %c1 = arith.constant 1 : index
    %c0_11 = arith.constant 0 : index
    %11 = vector.load %arg3[%c1, %c0_11] : memref<8x256xf32, #tpu.memory_space<vmem>>, vector<1x64xf32>
    %c2 = arith.constant 2 : index
    %c0_12 = arith.constant 0 : index
    %12 = vector.load %arg3[%c2, %c0_12] : memref<8x256xf32, #tpu.memory_space<vmem>>, vector<1x192xf32>
    %c3 = arith.constant 3 : index
    %c0_13 = arith.constant 0 : index
    %13 = vector.load %arg3[%c3, %c0_13] : memref<8x256xf32, #tpu.memory_space<vmem>>, vector<1x64xf32>
    %c4 = arith.constant 4 : index
    %c0_14 = arith.constant 0 : index
    %14 = vector.load %arg3[%c4, %c0_14] : memref<8x256xf32, #tpu.memory_space<vmem>>, vector<1x32xf32>
    %c5 = arith.constant 5 : index
    %c0_15 = arith.constant 0 : index
    %15 = vector.load %arg3[%c5, %c0_15] : memref<8x256xf32, #tpu.memory_space<vmem>>, vector<1x1xf32>
    %cst = arith.constant dense<0.000000e+00> : vector<128x256xf32>
    %16 = tpu.matmul %1, %3, %cst {dimension_numbers = #tpu.dot_dimension_numbers<[1], [0], [0], [1], [0, 0, 1, 1], [], []>} : vector<128x17xbf16>, vector<17x256xbf16>, vector<128x256xf32> -> vector<128x256xf32>
    %17 = vector.broadcast %10 : vector<1x256xf32> to vector<128x256xf32>
    %18 = arith.addf %16, %17 : vector<128x256xf32>
    %cst_16 = arith.constant 0.000000e+00 : f32
    %19 = vector.broadcast %cst_16 : f32 to vector<128x256xf32>
    %20 = arith.maximumf %18, %19 : vector<128x256xf32>
    %21 = arith.truncf %20 : vector<128x256xf32> to vector<128x256xbf16>
    %cst_17 = arith.constant dense<0.000000e+00> : vector<128x64xf32>
    %22 = tpu.matmul %21, %4, %cst_17 {dimension_numbers = #tpu.dot_dimension_numbers<[1], [0], [0], [1], [0, 0, 1, 1], [], []>} : vector<128x256xbf16>, vector<256x64xbf16>, vector<128x64xf32> -> vector<128x64xf32>
    %23 = vector.broadcast %11 : vector<1x64xf32> to vector<128x64xf32>
    %24 = arith.addf %22, %23 : vector<128x64xf32>
    %cst_18 = arith.constant 0.000000e+00 : f32
    %25 = vector.broadcast %cst_18 : f32 to vector<128x64xf32>
    %26 = arith.maximumf %24, %25 : vector<128x64xf32>
    %27 = vector.broadcast %2 : vector<128x1xf32> to vector<128x64xf32>
    %28 = arith.mulf %26, %27 : vector<128x64xf32>
    %29 = vector.shape_cast %28 : vector<128x64xf32> to vector<16x8x64xf32>
    %cst_19 = arith.constant dense<0.000000e+00> : vector<16x64xf32>
    %30 = vector.multi_reduction <add>, %29, %cst_19 [1] : vector<16x8x64xf32> to vector<16x64xf32>
    %31 = arith.truncf %30 : vector<16x64xf32> to vector<16x64xbf16>
    %cst_20 = arith.constant dense<0.000000e+00> : vector<16x192xf32>
    %32 = tpu.matmul %31, %5, %cst_20 {dimension_numbers = #tpu.dot_dimension_numbers<[1], [0], [0], [1], [0, 0, 1, 1], [], []>} : vector<16x64xbf16>, vector<64x192xbf16>, vector<16x192xf32> -> vector<16x192xf32>
    %33 = vector.broadcast %12 : vector<1x192xf32> to vector<16x192xf32>
    %34 = arith.addf %32, %33 : vector<16x192xf32>
    %cst_21 = arith.constant 0.000000e+00 : f32
    %35 = vector.broadcast %cst_21 : f32 to vector<16x192xf32>
    %36 = arith.maximumf %34, %35 : vector<16x192xf32>
    %37 = arith.truncf %36 : vector<16x192xf32> to vector<16x192xbf16>
    %cst_22 = arith.constant dense<0.000000e+00> : vector<16x64xf32>
    %38 = tpu.matmul %37, %6, %cst_22 {dimension_numbers = #tpu.dot_dimension_numbers<[1], [0], [0], [1], [0, 0, 1, 1], [], []>} : vector<16x192xbf16>, vector<192x64xbf16>, vector<16x64xf32> -> vector<16x64xf32>
    %39 = vector.broadcast %13 : vector<1x64xf32> to vector<16x64xf32>
    %40 = arith.addf %38, %39 : vector<16x64xf32>
    %cst_23 = arith.constant 0.000000e+00 : f32
    %41 = vector.broadcast %cst_23 : f32 to vector<16x64xf32>
    %42 = arith.maximumf %40, %41 : vector<16x64xf32>
    %43 = arith.truncf %42 : vector<16x64xf32> to vector<16x64xbf16>
    %cst_24 = arith.constant dense<0.000000e+00> : vector<16x32xf32>
    %44 = tpu.matmul %43, %7, %cst_24 {dimension_numbers = #tpu.dot_dimension_numbers<[1], [0], [0], [1], [0, 0, 1, 1], [], []>} : vector<16x64xbf16>, vector<64x32xbf16>, vector<16x32xf32> -> vector<16x32xf32>
    %45 = vector.broadcast %14 : vector<1x32xf32> to vector<16x32xf32>
    %46 = arith.addf %44, %45 : vector<16x32xf32>
    %cst_25 = arith.constant 0.000000e+00 : f32
    %47 = vector.broadcast %cst_25 : f32 to vector<16x32xf32>
    %48 = arith.maximumf %46, %47 : vector<16x32xf32>
    %cst_26 = arith.constant dense<0.000000e+00> : vector<1x16xf32>
    %49 = tpu.matmul %8, %31, %cst_26 {dimension_numbers = #tpu.dot_dimension_numbers<[1], [1], [0], [0], [0, 0, 1, 0], [], []>} : vector<1x64xbf16>, vector<16x64xbf16>, vector<1x16xf32> -> vector<1x16xf32>
    %50 = arith.truncf %48 : vector<16x32xf32> to vector<16x32xbf16>
    %cst_27 = arith.constant dense<0.000000e+00> : vector<1x16xf32>
    %51 = tpu.matmul %9, %50, %cst_27 {dimension_numbers = #tpu.dot_dimension_numbers<[1], [1], [0], [0], [0, 0, 1, 0], [], []>} : vector<1x32xbf16>, vector<16x32xbf16>, vector<1x16xf32> -> vector<1x16xf32>
    %52 = arith.addf %49, %51 : vector<1x16xf32>
    %53 = vector.broadcast %15 : vector<1x1xf32> to vector<1x16xf32>
    %54 = arith.addf %52, %53 : vector<1x16xf32>
    %55 = vector.shape_cast %54 : vector<1x16xf32> to vector<1x1x16xf32>
    %c0_28 = arith.constant 0 : index
    %c0_29 = arith.constant 0 : index
    %c0_30 = arith.constant 0 : index
    %56 = vector.load %arg4[%c0_28, %c0_29, %c0_30] : memref<1x1x16xf32, #tpu.memory_space<vmem>>, vector<1x1x16xf32>
    tpu.vector_store %arg4[%c0_28, %c0_29, %c0_30], %55 {strides = array<i32>} : memref<1x1x16xf32, #tpu.memory_space<vmem>>, vector<1x1x16xf32>,
    return
  }
  func.func @transform_0(%arg0: i32) -> (i32, i32) {
    %c0_i32 = arith.constant 0 : i32
    %c0_i32_0 = arith.constant 0 : i32
    return %arg0, %c0_i32 : i32, i32
  }
  func.func @transform_1(%arg0: i32) -> (i32, i32) {
    %c0_i32 = arith.constant 0 : i32
    %c0_i32_0 = arith.constant 0 : i32
    %c0_i32_1 = arith.constant 0 : i32
    return %c0_i32, %c0_i32_0 : i32, i32
  }
  func.func @transform_2(%arg0: i32) -> (i32, i32) {
    %c0_i32 = arith.constant 0 : i32
    %c0_i32_0 = arith.constant 0 : i32
    %c0_i32_1 = arith.constant 0 : i32
    return %c0_i32, %c0_i32_0 : i32, i32
  }
  func.func @transform_3(%arg0: i32) -> (i32, i32, i32) {
    %c0_i32 = arith.constant 0 : i32
    %c0_i32_0 = arith.constant 0 : i32
    %c0_i32_1 = arith.constant 0 : i32
    return %arg0, %c0_i32, %c0_i32_0 : i32, i32, i32
  }
}

</mosaic_0001>

<llo_original>
// kernel: tpu_custom_call.1
$region0: #{tpu_custom_call.1}
  #allocation0 [shape = 'u32[]', space=smem, size = 0x4, offset = 0x4, fixed_abs, tag = 'smem constant byte address 0x4 - core index']
  #allocation1 [shape = 'u32[144,128]{1,0:T(1,128)}', space=vmem, size = 0x12000, scoped, tag = 'internal scratch']
  %s0 = inlined_call_operand.vmem [shape: f32[128,17], index: 0, kind: input, shape index: {}]
  %s1 = inlined_call_operand.hbm [shape: bf16[624,256], index: 1, kind: input, shape index: {}]
  %s2 = inlined_call_operand.vmem [shape: f32[8,256], index: 2, kind: input, shape index: {}]
  %s3 = inlined_call_operand.hbm [shape: f32[1,1,16], index: 3, kind: output, shape index: {}]
  %s4 = sld [smem:[#allocation0]]
  $region26: #{tpu_custom_call.1} parent=0
    _
  %s6 = ssub.s32 1, %s4
  %s7 = scalar_select 0, %s6, %s4
  $region1: #{tpu_custom_call.1} parent=0
    #allocation2 [shape = 'u8[319488]{0}', space=vmem, size = 0x4e000, scoped, tag = 'input window, operand 1, single buffered']
    #allocation3 [shape = 's32[1]{0}', space=sflag, size = 0x4, scoped, tag = 'scoped memory for tpu_custom_call.1']
    #allocation4 [shape = 's32[1]{0}', space=sflag, size = 0x4, scoped, tag = 'scoped memory for tpu_custom_call.1']
    #allocation5 [shape = 'u8[512]{0}', space=vmem, size = 0x400, scoped, tag = 'output window, operand 0, single buffered']
    %8 = vsyncpa [#allocation3], 0
    %9 = vsyncpa [#allocation4], 0
    // Predicated region
    $region2: #{tpu_custom_call.1} parent=1 // pred_check
      _
    $region3: #{tpu_custom_call.1} parent=1 // pred_check_branch
      %11 = sbr.rel (0) target = $region5
    $region4: #{tpu_custom_call.1} parent=1 // pred_region
      _
    $region5: #{tpu_custom_call.1} parent=1 // pred_fallthru
      _
    // Predicated region
    $region6: #{tpu_custom_call.1} parent=1 // pred_check
      _
    $region7: #{tpu_custom_call.1} parent=1 // pred_check_branch
      %13 = sbr.rel (0) target = $region9
    $region8: #{tpu_custom_call.1} parent=1 // pred_region
      %s15 = ssub.s32 9984, 9984
      %16 = vsyncadd [#allocation3], %s15
      %s17 = sshll.u32 [#allocation2], 4
      %s18 = int_to_ptr.vmem [resolvable:$true] %s17
      %23 = dma.hbm_to_vmem [thread:$0]  %s1, 9984, %s18, [#allocation3], 128, 128, 8
    $region9: #{tpu_custom_call.1} parent=1 // pred_fallthru
      _
    // Predicated region
    $region10: #{tpu_custom_call.1} parent=1 // pred_check
      _
    $region11: #{tpu_custom_call.1} parent=1 // pred_check_branch
      %25 = sbr.rel (0) target = $region13
    $region12: #{tpu_custom_call.1} parent=1 // pred_region
      _
    $region13: #{tpu_custom_call.1} parent=1 // pred_fallthru
      _
    // Predicated region
    $region14: #{tpu_custom_call.1} parent=1 // pred_check
      _
    $region15: #{tpu_custom_call.1} parent=1 // pred_check_branch
      %27 = sbr.rel (0) target = $region17
    $region16: #{tpu_custom_call.1} parent=1 // pred_region
      %28 = dma.done [#allocation3], 9984
    $region17: #{tpu_custom_call.1} parent=1 // pred_fallthru
      _
    %v30 = vld [vmem:[%s0] sm:$0xff]
    %v31 = vld [vmem:[%s0 + $0x8] sm:$0xff]
    %v32 = vld [vmem:[%s0 + $0x10] sm:$0xff]
    %v33 = vld [vmem:[%s0 + $0x18] sm:$0xff]
    %v34 = vld [vmem:[%s0 + $0x20] sm:$0xff]
    %v35 = vld [vmem:[%s0 + $0x28] sm:$0xff]
    %v36 = vld [vmem:[%s0 + $0x30] sm:$0xff]
    %v37 = vld [vmem:[%s0 + $0x38] sm:$0xff]
    %v38 = vld [vmem:[%s0 + $0x40] sm:$0xff]
    %v39 = vld [vmem:[%s0 + $0x48] sm:$0xff]
    %v40 = vld [vmem:[%s0 + $0x50] sm:$0xff]
    %v41 = vld [vmem:[%s0 + $0x58] sm:$0xff]
    %v42 = vld [vmem:[%s0 + $0x60] sm:$0xff]
    %v43 = vld [vmem:[%s0 + $0x68] sm:$0xff]
    %v44 = vld [vmem:[%s0 + $0x70] sm:$0xff]
    %v45 = vld [vmem:[%s0 + $0x78] sm:$0xff]
    %v46 = vpack.c.bf16 %v31, %v30
    %v47 = vpack.c.bf16 %v33, %v32
    %v48 = vpack.c.bf16 %v35, %v34
    %v49 = vpack.c.bf16 %v37, %v36
    %v50 = vpack.c.bf16 %v39, %v38
    %v51 = vpack.c.bf16 %v41, %v40
    %v52 = vpack.c.bf16 %v43, %v42
    %v53 = vpack.c.bf16 %v45, %v44
    %v54 = vld [vmem:[#allocation2] sm:$0xff]
    %v55 = vld [vmem:[#allocation2 + $0x8] sm:$0xff]
    %v56 = vld [vmem:[#allocation2 + $0x10] sm:$0x11]
    %v57 = vld [vmem:[#allocation2 + $0x20] sm:$0xf]
    %v58 = vld [vmem:[#allocation2 + $0x28] sm:$0xf]
    %v59 = vld [vmem:[#allocation2 + $0x30] sm:$0xf]
    %v60 = vld [vmem:[#allocation2 + $0x38] sm:$0xf]
    %v61 = vld [vmem:[#allocation2 + $0x40] sm:$0xf]
    %v62 = vld [vmem:[#allocation2 + $0x48] sm:$0xf]
    %v63 = vld [vmem:[#allocation2 + $0x50] sm:$0xf]
    %v64 = vld [vmem:[#allocation2 + $0x58] sm:$0xf]
    %v65 = vld [vmem:[#allocation2 + $0x60] sm:$0xf]
    %v66 = vld [vmem:[#allocation2 + $0x68] sm:$0xf]
    %v67 = vld [vmem:[#allocation2 + $0x70] sm:$0xf]
    %v68 = vld [vmem:[#allocation2 + $0x78] sm:$0xf]
    %v69 = vld [vmem:[#allocation2 + $0x80] sm:$0xf]
    %v70 = vld [vmem:[#allocation2 + $0x88] sm:$0xf]
    %v71 = vld [vmem:[#allocation2 + $0x90] sm:$0xf]
    %v72 = vld [vmem:[#allocation2 + $0x98] sm:$0xf]
    %v73 = vld [vmem:[#allocation2 + $0xa0] sm:$0xf]
    %v74 = vld [vmem:[#allocation2 + $0xa8] sm:$0xf]
    %v75 = vld [vmem:[#allocation2 + $0xb0] sm:$0xf]
    %v76 = vld [vmem:[#allocation2 + $0xb8] sm:$0xf]
    %v77 = vld [vmem:[#allocation2 + $0xc0] sm:$0xf]
    %v78 = vld [vmem:[#allocation2 + $0xc8] sm:$0xf]
    %v79 = vld [vmem:[#allocation2 + $0xd0] sm:$0xf]
    %v80 = vld [vmem:[#allocation2 + $0xd8] sm:$0xf]
    %v81 = vld [vmem:[#allocation2 + $0xe0] sm:$0xf]
    %v82 = vld [vmem:[#allocation2 + $0xe8] sm:$0xf]
    %v83 = vld [vmem:[#allocation2 + $0xf0] sm:$0xf]
    %v84 = vld [vmem:[#allocation2 + $0xf8] sm:$0xf]
    %v85 = vld [vmem:[#allocation2 + $0x100] sm:$0xf]
    %v86 = vld [vmem:[#allocation2 + $0x108] sm:$0xf]
    %v87 = vld [vmem:[#allocation2 + $0x110] sm:$0xf]
    %v88 = vld [vmem:[#allocation2 + $0x118] sm:$0xf]
    %v89 = vld [vmem:[#allocation2 + $0x120] sm:$0xff]
    %v90 = vld [vmem:[#allocation2 + $0x128] sm:$0xff]
    %v91 = vld [vmem:[#allocation2 + $0x130] sm:$0xff]
    %v92 = vld [vmem:[#allocation2 + $0x138] sm:$0xff]
    %v93 = vld [vmem:[#allocation2 + $0x140] sm:$0xff]
    %v94 = vld [vmem:[#allocation2 + $0x148] sm:$0xff]
    %v95 = vld [vmem:[#allocation2 + $0x150] sm:$0xff]
    %v96 = vld [vmem:[#allocation2 + $0x158] sm:$0xff]
    %v97 = vld [vmem:[#allocation2 + $0x160] sm:$0xf]
    %v98 = vld [vmem:[#allocation2 + $0x168] sm:$0xf]
    %v99 = vld [vmem:[#allocation2 + $0x170] sm:$0xf]
    %v100 = vld [vmem:[#allocation2 + $0x178] sm:$0xf]
    %v101 = vld [vmem:[#allocation2 + $0x180] sm:$0xf]
    %v102 = vld [vmem:[#allocation2 + $0x188] sm:$0xf]
    %v103 = vld [vmem:[#allocation2 + $0x190] sm:$0xf]
    %v104 = vld [vmem:[#allocation2 + $0x198] sm:$0xf]
    %v105 = vld [vmem:[#allocation2 + $0x1a0] sm:$0xf]
    %v106 = vld [vmem:[#allocation2 + $0x1a8] sm:$0xf]
    %v107 = vld [vmem:[#allocation2 + $0x1b0] sm:$0xf]
    %v108 = vld [vmem:[#allocation2 + $0x1b8] sm:$0xf]
    %v109 = vld [vmem:[#allocation2 + $0x1c0] sm:$0xf]
    %v110 = vld [vmem:[#allocation2 + $0x1c8] sm:$0xf]
    %v111 = vld [vmem:[#allocation2 + $0x1d0] sm:$0xf]
    %v112 = vld [vmem:[#allocation2 + $0x1d8] sm:$0xf]
    %v113 = vld [vmem:[#allocation2 + $0x1e0] sm:$0xf]
    %v114 = vld [vmem:[#allocation2 + $0x1e8] sm:$0xf]
    %v115 = vld [vmem:[#allocation2 + $0x1f0] sm:$0xf]
    %v116 = vld [vmem:[#allocation2 + $0x1f8] sm:$0xf]
    %v117 = vld [vmem:[#allocation2 + $0x200] sm:$0xf]
    %v118 = vld [vmem:[#allocation2 + $0x208] sm:$0xf]
    %v119 = vld [vmem:[#allocation2 + $0x210] sm:$0xf]
    %v120 = vld [vmem:[#allocation2 + $0x218] sm:$0xf]
    %v121 = vld [vmem:[#allocation2 + $0x220] sm:$0xf]
    %v122 = vld [vmem:[#allocation2 + $0x228] sm:$0xf]
    %v123 = vld [vmem:[#allocation2 + $0x230] sm:$0xf]
    %v124 = vld [vmem:[#allocation2 + $0x238] sm:$0xf]
    %v125 = vld [vmem:[#allocation2 + $0x240] sm:$0xf]
    %v126 = vld [vmem:[#allocation2 + $0x248] sm:$0xf]
    %v127 = vld [vmem:[#allocation2 + $0x250] sm:$0xf]
    %v128 = vld [vmem:[#allocation2 + $0x258] sm:$0xf]
    %v129 = vld [vmem:[#allocation2 + $0x260] sm:$0x1]
    %v130 = vld [vmem:[%s2] ss:$8 sm:$0x3]
    %v131 = vld [vmem:[%s2 + $0x1] ss:$0 sm:$0xff]
    %s132 = scalar_lea.vmem %s2, 2
    %v133 = vld [vmem:[%s132] ss:$8 sm:$0x3]
    %v134 = vld [vmem:[%s2 + $0x3] ss:$0 sm:$0xff]
    %v135 = vld [vmem:[%s2 + $0x4] ss:$0 sm:$0xff]
    %v136 = vld [vmem:[%s2 + $0x5] ss:$0 sm:$0xff]
    %v138 = vlaneseq
    %v139 = vshrl.u32 %v138, 7
    %v140 = vsub.s32 0, %v139
    %v141 = vrot.slane %v130, %v140
    %v142 = vlaneseq
    %v143 = vshrl.u32 %v142, 7
    %v144 = vsub.s32 1, %v143
    %v145 = vrot.slane %v130, %v144
    %v151 = vunpack.c.l.b16 %v54
    %v152 = vunpack.c.h.b16 %v54
    %v153 = vunpack.c.l.b16 %v55
    %v154 = vunpack.c.h.b16 %v55
    %v155 = vunpack.c.l.b16 %v56
    %v156 = vunpack.c.h.b16 %v56
    %v157 = vpack.c.b16 %v153, %v151
    %v158 = vpack.c.b16 %v154, %v152
    %v159 = vpack.c.b16 %v155, %v155
    %v160 = vpack.c.b16 %v156, %v156
    %vm163 = vcmask 138240
    %v165 = vsel %vm163, %v46, 0
    %v168 = vsel %vm163, %v47, 0
    %v171 = vsel %vm163, %v48, 0
    %v174 = vsel %vm163, %v49, 0
    %v177 = vsel %vm163, %v50, 0
    %v180 = vsel %vm163, %v51, 0
    %v183 = vsel %vm163, %v52, 0
    %v186 = vsel %vm163, %v53, 0
    %vm188 = vcmask 1040384
    %v189 = vsel 0, 4294967295, 65535
    %v190 = vsel %vm188, %v189, 0
    %v192 = vand.u32 %v159, %v190
    %v195 = vand.u32 %v160, %v190
    %197 = vmatprep.subr.bf16.mxu0 %v158
    %198 = vmatpush1.bf16.msra.mxu0 %v157
    %199 = vmatprep.subr.bf16.mxu0 %v195
    %200 = vmatpush1.bf16.msra.mxu0 %v192
    %201 = vmatprep.subr.bf16.mxu0 0
    %202 = vmatpush1.bf16.msra.mxu0 0
    %203 = vmatprep.subr.bf16.mxu0 0
    %204 = vmatpush1.bf16.msra.mxu0 0
    %205 = vmatprep.subr.bf16.mxu0 0
    %206 = vmatpush1.bf16.msra.mxu0 0
    %207 = vmatprep.subr.bf16.mxu0 0
    %208 = vmatpush1.bf16.msra.mxu0 0
    %209 = vmatprep.subr.bf16.mxu0 0
    %210 = vmatpush1.bf16.msra.mxu0 0
    %211 = vmatprep.subr.bf16.mxu0 0
    %212 = vmatpush1.bf16.msra.mxu0 0
    %213 = vmatprep.subr.bf16.mxu0 0
    %214 = vmatpush1.bf16.msra.mxu0 0
    %215 = vmatprep.subr.bf16.mxu0 0
    %216 = vmatpush1.bf16.msra.mxu0 0
    %217 = vmatprep.subr.bf16.mxu0 0
    %218 = vmatpush1.bf16.msra.mxu0 0
    %219 = vmatprep.subr.bf16.mxu0 0
    %220 = vmatpush1.bf16.msra.mxu0 0
    %221 = vmatprep.subr.bf16.mxu0 0
    %222 = vmatpush1.bf16.msra.mxu0 0
    %223 = vmatprep.subr.bf16.mxu0 0
    %224 = vmatpush1.bf16.msra.mxu0 0
    %225 = vmatprep.subr.bf16.mxu0 0
    %226 = vmatpush1.bf16.msra.mxu0 0
    %227 = vmatprep.subr.bf16.mxu0 0
    %228 = vmatpush1.bf16.msra.mxu0 0
    %229 = vmatprep.mubr.bf16.mxu0 0
    %230 = vmatmul.mubr.bf16.gmra.mrb[0].mxu0 %v165
    %v231 = vpop.f32.mrb[0].mxu0
    %v232 = vadd.f32 %v141, %v231
    %v233 = vpop.f32.mrb[0].mxu0
    %v234 = vadd.f32 %v145, %v233
    %v235 = vpop.f32.mrb[0].mxu0
    %v236 = vadd.f32 %v141, %v235
    %v237 = vpop.f32.mrb[0].mxu0
    %v238 = vadd.f32 %v145, %v237
    %239 = vmatprep.mubr.bf16.mxu0 0
    %240 = vmatmul.mubr.bf16.gmra.mrb[0].mxu0 %v168
    %v241 = vpop.f32.mrb[0].mxu0
    %v242 = vadd.f32 %v141, %v241
    %v243 = vpop.f32.mrb[0].mxu0
    %v244 = vadd.f32 %v145, %v243
    %v245 = vpop.f32.mrb[0].mxu0
    %v246 = vadd.f32 %v141, %v245
    %v247 = vpop.f32.mrb[0].mxu0
    %v248 = vadd.f32 %v145, %v247
    %249 = vmatprep.mubr.bf16.mxu0 0
    %250 = vmatmul.mubr.bf16.gmra.mrb[0].mxu0 %v171
    %v251 = vpop.f32.mrb[0].mxu0
    %v252 = vadd.f32 %v141, %v251
    %v253 = vpop.f32.mrb[0].mxu0
    %v254 = vadd.f32 %v145, %v253
    %v255 = vpop.f32.mrb[0].mxu0
    %v256 = vadd.f32 %v141, %v255
    %v257 = vpop.f32.mrb[0].mxu0
    %v258 = vadd.f32 %v145, %v257
    %259 = vmatprep.mubr.bf16.mxu0 0
    %260 = vmatmul.mubr.bf16.gmra.mrb[0].mxu0 %v174
    %v261 = vpop.f32.mrb[0].mxu0
    %v262 = vadd.f32 %v141, %v261
    %v263 = vpop.f32.mrb[0].mxu0
    %v264 = vadd.f32 %v145, %v263
    %v265 = vpop.f32.mrb[0].mxu0
    %v266 = vadd.f32 %v141, %v265
    %v267 = vpop.f32.mrb[0].mxu0
    %v268 = vadd.f32 %v145, %v267
    %269 = vmatprep.mubr.bf16.mxu0 0
    %270 = vmatmul.mubr.bf16.gmra.mrb[0].mxu0 %v177
    %v271 = vpop.f32.mrb[0].mxu0
    %v272 = vadd.f32 %v141, %v271
    %v273 = vpop.f32.mrb[0].mxu0
    %v274 = vadd.f32 %v145, %v273
    %v275 = vpop.f32.mrb[0].mxu0
    %v276 = vadd.f32 %v141, %v275
    %v277 = vpop.f32.mrb[0].mxu0
    %v278 = vadd.f32 %v145, %v277
    %279 = vmatprep.mubr.bf16.mxu0 0
    %280 = vmatmul.mubr.bf16.gmra.mrb[0].mxu0 %v180
    %v281 = vpop.f32.mrb[0].mxu0
    %v282 = vadd.f32 %v141, %v281
    %v283 = vpop.f32.mrb[0].mxu0
    %v284 = vadd.f32 %v145, %v283
    %v285 = vpop.f32.mrb[0].mxu0
    %v286 = vadd.f32 %v141, %v285
    %v287 = vpop.f32.mrb[0].mxu0
    %v288 = vadd.f32 %v145, %v287
    %289 = vmatprep.mubr.bf16.mxu0 0
    %290 = vmatmul.mubr.bf16.gmra.mrb[0].mxu0 %v183
    %v291 = vpop.f32.mrb[0].mxu0
    %v292 = vadd.f32 %v141, %v291
    %v293 = vpop.f32.mrb[0].mxu0
    %v294 = vadd.f32 %v145, %v293
    %v295 = vpop.f32.mrb[0].mxu0
    %v296 = vadd.f32 %v141, %v295
    %v297 = vpop.f32.mrb[0].mxu0
    %v298 = vadd.f32 %v145, %v297
    %299 = vmatprep.mubr.bf16.mxu0 0
    %300 = vmatmul.mubr.bf16.gmra.mrb[0].mxu0 %v186
    %v301 = vpop.f32.mrb[0].mxu0
    %v302 = vadd.f32 %v141, %v301
    %v303 = vpop.f32.mrb[0].mxu0
    %v304 = vadd.f32 %v145, %v303
    %v305 = vpop.f32.mrb[0].mxu0
    %v306 = vadd.f32 %v141, %v305
    %v307 = vpop.f32.mrb[0].mxu0
    %v308 = vadd.f32 %v145, %v307
    %309 = vdwg.mxu0
    %v310 = vmax.f32 %v232, 0.0
    %v311 = vmax.f32 %v234, 0.0
    %v312 = vmax.f32 %v236, 0.0
    %v313 = vmax.f32 %v238, 0.0
    %v314 = vmax.f32 %v242, 0.0
    %v315 = vmax.f32 %v244, 0.0
    %v316 = vmax.f32 %v246, 0.0
    %v317 = vmax.f32 %v248, 0.0
    %v318 = vmax.f32 %v252, 0.0
    %v319 = vmax.f32 %v254, 0.0
    %v320 = vmax.f32 %v256, 0.0
    %v321 = vmax.f32 %v258, 0.0
    %v322 = vmax.f32 %v262, 0.0
    %v323 = vmax.f32 %v264, 0.0
    %v324 = vmax.f32 %v266, 0.0
    %v325 = vmax.f32 %v268, 0.0
    %v326 = vmax.f32 %v272, 0.0
    %v327 = vmax.f32 %v274, 0.0
    %v328 = vmax.f32 %v276, 0.0
    %v329 = vmax.f32 %v278, 0.0
    %v330 = vmax.f32 %v282, 0.0
    %v331 = vmax.f32 %v284, 0.0
    %v332 = vmax.f32 %v286, 0.0
    %v333 = vmax.f32 %v288, 0.0
    %v334 = vmax.f32 %v292, 0.0
    %v335 = vmax.f32 %v294, 0.0
    %v336 = vmax.f32 %v296, 0.0
    %v337 = vmax.f32 %v298, 0.0
    %v338 = vmax.f32 %v302, 0.0
    %v339 = vmax.f32 %v304, 0.0
    %v340 = vmax.f32 %v306, 0.0
    %v341 = vmax.f32 %v308, 0.0
    %v342 = vpack.c.bf16 %v312, %v310
    %v343 = vpack.c.bf16 %v313, %v311
    %v344 = vpack.c.bf16 %v316, %v314
    %v345 = vpack.c.bf16 %v317, %v315
    %v346 = vpack.c.bf16 %v320, %v318
    %v347 = vpack.c.bf16 %v321, %v319
    %v348 = vpack.c.bf16 %v324, %v322
    %v349 = vpack.c.bf16 %v325, %v323
    %v350 = vpack.c.bf16 %v328, %v326
    %v351 = vpack.c.bf16 %v329, %v327
    %v352 = vpack.c.bf16 %v332, %v330
    %v353 = vpack.c.bf16 %v333, %v331
    %v354 = vpack.c.bf16 %v336, %v334
    %v355 = vpack.c.bf16 %v337, %v335
    %v356 = vpack.c.bf16 %v340, %v338
    %v357 = vpack.c.bf16 %v341, %v339
    %v390 = vunpack.c.l.b16 %v57
    %v391 = vunpack.c.l.b16 %v58
    %v392 = vunpack.c.l.b16 %v59
    %v393 = vunpack.c.l.b16 %v60
    %v394 = vunpack.c.l.b16 %v61
    %v395 = vunpack.c.l.b16 %v62
    %v396 = vunpack.c.l.b16 %v63
    %v397 = vunpack.c.l.b16 %v64
    %v398 = vunpack.c.l.b16 %v65
    %v399 = vunpack.c.l.b16 %v66
    %v400 = vunpack.c.l.b16 %v67
    %v401 = vunpack.c.l.b16 %v68
    %v402 = vunpack.c.l.b16 %v69
    %v403 = vunpack.c.l.b16 %v70
    %v404 = vunpack.c.l.b16 %v71
    %v405 = vunpack.c.l.b16 %v72
    %v406 = vunpack.c.l.b16 %v73
    %v407 = vunpack.c.l.b16 %v74
    %v408 = vunpack.c.l.b16 %v75
    %v409 = vunpack.c.l.b16 %v76
    %v410 = vunpack.c.l.b16 %v77
    %v411 = vunpack.c.l.b16 %v78
    %v412 = vunpack.c.l.b16 %v79
    %v413 = vunpack.c.l.b16 %v80
    %v414 = vunpack.c.l.b16 %v81
    %v415 = vunpack.c.l.b16 %v82
    %v416 = vunpack.c.l.b16 %v83
    %v417 = vunpack.c.l.b16 %v84
    %v418 = vunpack.c.l.b16 %v85
    %v419 = vunpack.c.l.b16 %v86
    %v420 = vunpack.c.l.b16 %v87
    %v421 = vunpack.c.l.b16 %v88
    %v422 = vpack.c.b16 %v391, %v390
    %v423 = vpack.c.b16 %v393, %v392
    %v424 = vpack.c.b16 %v395, %v394
    %v425 = vpack.c.b16 %v397, %v396
    %v426 = vpack.c.b16 %v399, %v398
    %v427 = vpack.c.b16 %v401, %v400
    %v428 = vpack.c.b16 %v403, %v402
    %v429 = vpack.c.b16 %v405, %v404
    %v430 = vpack.c.b16 %v407, %v406
    %v431 = vpack.c.b16 %v409, %v408
    %v432 = vpack.c.b16 %v411, %v410
    %v433 = vpack.c.b16 %v413, %v412
    %v434 = vpack.c.b16 %v415, %v414
    %v435 = vpack.c.b16 %v417, %v416
    %v436 = vpack.c.b16 %v419, %v418
    %v437 = vpack.c.b16 %v421, %v420
    %454 = vmatprep.subr.bf16.mxu0 0
    %455 = vmatpush1.bf16.msra.mxu0 %v422
    %456 = vmatprep.subr.bf16.mxu0 0
    %457 = vmatpush1.bf16.msra.mxu0 %v423
    %458 = vmatprep.subr.bf16.mxu0 0
    %459 = vmatpush1.bf16.msra.mxu0 %v424
    %460 = vmatprep.subr.bf16.mxu0 0
    %461 = vmatpush1.bf16.msra.mxu0 %v425
    %462 = vmatprep.subr.bf16.mxu0 0
    %463 = vmatpush1.bf16.msra.mxu0 %v426
    %464 = vmatprep.subr.bf16.mxu0 0
    %465 = vmatpush1.bf16.msra.mxu0 %v427
    %466 = vmatprep.subr.bf16.mxu0 0
    %467 = vmatpush1.bf16.msra.mxu0 %v428
    %468 = vmatprep.subr.bf16.mxu0 0
    %469 = vmatpush1.bf16.msra.mxu0 %v429
    %470 = vmatprep.subr.bf16.mxu0 0
    %471 = vmatpush1.bf16.msra.mxu0 %v430
    %472 = vmatprep.subr.bf16.mxu0 0
    %473 = vmatpush1.bf16.msra.mxu0 %v431
    %474 = vmatprep.subr.bf16.mxu0 0
    %475 = vmatpush1.bf16.msra.mxu0 %v432
    %476 = vmatprep.subr.bf16.mxu0 0
    %477 = vmatpush1.bf16.msra.mxu0 %v433
    %478 = vmatprep.subr.bf16.mxu0 0
    %479 = vmatpush1.bf16.msra.mxu0 %v434
    %480 = vmatprep.subr.bf16.mxu0 0
    %481 = vmatpush1.bf16.msra.mxu0 %v435
    %482 = vmatprep.subr.bf16.mxu0 0
    %483 = vmatpush1.bf16.msra.mxu0 %v436
    %484 = vmatprep.subr.bf16.mxu0 0
    %485 = vmatpush1.bf16.msra.mxu0 %v437
    %486 = vmatprep.mubr.bf16.mxu0 %v343
    %487 = vmatmul.mubr.bf16.gmra.mrb[0].mxu0 %v342
    %v488 = vpop.f32.mrb[0].mxu0
    %v489 = vadd.f32 %v131, %v488
    %v490 = vpop.f32.mrb[0].mxu0
    %v491 = vpop.f32.mrb[0].mxu0
    %v492 = vadd.f32 %v131, %v491
    %v493 = vpop.f32.mrb[0].mxu0
    %494 = vmatprep.mubr.bf16.mxu0 %v345
    %495 = vmatmul.mubr.bf16.gmra.mrb[0].mxu0 %v344
    %v496 = vpop.f32.mrb[0].mxu0
    %v497 = vadd.f32 %v131, %v496
    %v498 = vpop.f32.mrb[0].mxu0
    %v499 = vpop.f32.mrb[0].mxu0
    %v500 = vadd.f32 %v131, %v499
    %v501 = vpop.f32.mrb[0].mxu0
    %502 = vmatprep.mubr.bf16.mxu0 %v347
    %503 = vmatmul.mubr.bf16.gmra.mrb[0].mxu0 %v346
    %v504 = vpop.f32.mrb[0].mxu0
    %v505 = vadd.f32 %v131, %v504
    %v506 = vpop.f32.mrb[0].mxu0
    %v507 = vpop.f32.mrb[0].mxu0
    %v508 = vadd.f32 %v131, %v507
    %v509 = vpop.f32.mrb[0].mxu0
    %510 = vmatprep.mubr.bf16.mxu0 %v349
    %511 = vmatmul.mubr.bf16.gmra.mrb[0].mxu0 %v348
    %v512 = vpop.f32.mrb[0].mxu0
    %v513 = vadd.f32 %v131, %v512
    %v514 = vpop.f32.mrb[0].mxu0
    %v515 = vpop.f32.mrb[0].mxu0
    %v516 = vadd.f32 %v131, %v515
    %v517 = vpop.f32.mrb[0].mxu0
    %518 = vmatprep.mubr.bf16.mxu0 %v351
    %519 = vmatmul.mubr.bf16.gmra.mrb[0].mxu0 %v350
    %v520 = vpop.f32.mrb[0].mxu0
    %v521 = vadd.f32 %v131, %v520
    %v522 = vpop.f32.mrb[0].mxu0
    %v523 = vpop.f32.mrb[0].mxu0
    %v524 = vadd.f32 %v131, %v523
    %v525 = vpop.f32.mrb[0].mxu0
    %526 = vmatprep.mubr.bf16.mxu0 %v353
    %527 = vmatmul.mubr.bf16.gmra.mrb[0].mxu0 %v352
    %v528 = vpop.f32.mrb[0].mxu0
    %v529 = vadd.f32 %v131, %v528
    %v530 = vpop.f32.mrb[0].mxu0
    %v531 = vpop.f32.mrb[0].mxu0
    %v532 = vadd.f32 %v131, %v531
    %v533 = vpop.f32.mrb[0].mxu0
    %534 = vmatprep.mubr.bf16.mxu0 %v355
    %535 = vmatmul.mubr.bf16.gmra.mrb[0].mxu0 %v354
    %v536 = vpop.f32.mrb[0].mxu0
    %v537 = vadd.f32 %v131, %v536
    %v538 = vpop.f32.mrb[0].mxu0
    %v539 = vpop.f32.mrb[0].mxu0
    %v540 = vadd.f32 %v131, %v539
    %v541 = vpop.f32.mrb[0].mxu0
    %542 = vmatprep.mubr.bf16.mxu0 %v357
    %543 = vmatmul.mubr.bf16.gmra.mrb[0].mxu0 %v356
    %v544 = vpop.f32.mrb[0].mxu0
    %v545 = vadd.f32 %v131, %v544
    %v546 = vpop.f32.mrb[0].mxu0
    %v547 = vpop.f32.mrb[0].mxu0
    %v548 = vadd.f32 %v131, %v547
    %v549 = vpop.f32.mrb[0].mxu0
    %550 = vdwg.mxu0
    %v551 = vmax.f32 %v489, 0.0
    %v552 = vmax.f32 %v492, 0.0
    %v553 = vmax.f32 %v497, 0.0
    %v554 = vmax.f32 %v500, 0.0
    %v555 = vmax.f32 %v505, 0.0
    %v556 = vmax.f32 %v508, 0.0
    %v557 = vmax.f32 %v513, 0.0
    %v558 = vmax.f32 %v516, 0.0
    %v559 = vmax.f32 %v521, 0.0
    %v560 = vmax.f32 %v524, 0.0
    %v561 = vmax.f32 %v529, 0.0
    %v562 = vmax.f32 %v532, 0.0
    %v563 = vmax.f32 %v537, 0.0
    %v564 = vmax.f32 %v540, 0.0
    %v565 = vmax.f32 %v545, 0.0
    %v566 = vmax.f32 %v548, 0.0
    %568 = vset.pattern.permute.xlu0 16
    %569 = vperm.xlu0 %568, %v30
    %v570 = vpop.permute.xlu0 %569
    %573 = vset.pattern.permute.xlu0 16
    %574 = vperm.xlu0 %573, %v31
    %v575 = vpop.permute.xlu0 %574
    %578 = vset.pattern.permute.xlu0 16
    %579 = vperm.xlu0 %578, %v32
    %v580 = vpop.permute.xlu0 %579
    %583 = vset.pattern.permute.xlu0 16
    %584 = vperm.xlu0 %583, %v33
    %v585 = vpop.permute.xlu0 %584
    %588 = vset.pattern.permute.xlu0 16
    %589 = vperm.xlu0 %588, %v34
    %v590 = vpop.permute.xlu0 %589
    %593 = vset.pattern.permute.xlu0 16
    %594 = vperm.xlu0 %593, %v35
    %v595 = vpop.permute.xlu0 %594
    %598 = vset.pattern.permute.xlu0 16
    %599 = vperm.xlu0 %598, %v36
    %v600 = vpop.permute.xlu0 %599
    %603 = vset.pattern.permute.xlu0 16
    %604 = vperm.xlu0 %603, %v37
    %v605 = vpop.permute.xlu0 %604
    %608 = vset.pattern.permute.xlu0 16
    %609 = vperm.xlu0 %608, %v38
    %v610 = vpop.permute.xlu0 %609
    %613 = vset.pattern.permute.xlu0 16
    %614 = vperm.xlu0 %613, %v39
    %v615 = vpop.permute.xlu0 %614
    %618 = vset.pattern.permute.xlu0 16
    %619 = vperm.xlu0 %618, %v40
    %v620 = vpop.permute.xlu0 %619
    %623 = vset.pattern.permute.xlu0 16
    %624 = vperm.xlu0 %623, %v41
    %v625 = vpop.permute.xlu0 %624
    %628 = vset.pattern.permute.xlu0 16
    %629 = vperm.xlu0 %628, %v42
    %v630 = vpop.permute.xlu0 %629
    %633 = vset.pattern.permute.xlu0 16
    %634 = vperm.xlu0 %633, %v43
    %v635 = vpop.permute.xlu0 %634
    %638 = vset.pattern.permute.xlu0 16
    %639 = vperm.xlu0 %638, %v44
    %v640 = vpop.permute.xlu0 %639
    %643 = vset.pattern.permute.xlu0 16
    %644 = vperm.xlu0 %643, %v45
    %v645 = vpop.permute.xlu0 %644
    %v647 = vmul.f32 %v551, %v570
    %v648 = vmul.f32 %v552, %v575
    %v649 = vmul.f32 %v553, %v580
    %v650 = vmul.f32 %v554, %v585
    %v651 = vmul.f32 %v555, %v590
    %v652 = vmul.f32 %v556, %v595
    %v653 = vmul.f32 %v557, %v600
    %v654 = vmul.f32 %v558, %v605
    %v655 = vmul.f32 %v559, %v610
    %v656 = vmul.f32 %v560, %v615
    %v657 = vmul.f32 %v561, %v620
    %v658 = vmul.f32 %v562, %v625
    %v659 = vmul.f32 %v563, %v630
    %v660 = vmul.f32 %v564, %v635
    %v661 = vmul.f32 %v565, %v640
    %v662 = vmul.f32 %v566, %v645
    %vm663 = vcmask 523264
    %v664 = vsel %vm663, %v647, 0.0
    %v665 = vrot.slane %v664, 4
    %v666 = vadd.f32 %v664, %v665
    %v667 = vrot.slane %v666, 2
    %v668 = vadd.f32 %v666, %v667
    %v669 = vrot.slane %v668, 1
    %v670 = vadd.f32 %v668, %v669
    %v671 = vsel %vm663, %v648, 0.0
    %v672 = vrot.slane %v671, 4
    %v673 = vadd.f32 %v671, %v672
    %v674 = vrot.slane %v673, 2
    %v675 = vadd.f32 %v673, %v674
    %v676 = vrot.slane %v675, 1
    %v677 = vadd.f32 %v675, %v676
    %v678 = vsel %vm663, %v649, 0.0
    %v679 = vrot.slane %v678, 4
    %v680 = vadd.f32 %v678, %v679
    %v681 = vrot.slane %v680, 2
    %v682 = vadd.f32 %v680, %v681
    %v683 = vrot.slane %v682, 1
    %v684 = vadd.f32 %v682, %v683
    %v685 = vsel %vm663, %v650, 0.0
    %v686 = vrot.slane %v685, 4
    %v687 = vadd.f32 %v685, %v686
    %v688 = vrot.slane %v687, 2
    %v689 = vadd.f32 %v687, %v688
    %v690 = vrot.slane %v689, 1
    %v691 = vadd.f32 %v689, %v690
    %v692 = vsel %vm663, %v651, 0.0
    %v693 = vrot.slane %v692, 4
    %v694 = vadd.f32 %v692, %v693
    %v695 = vrot.slane %v694, 2
    %v696 = vadd.f32 %v694, %v695
    %v697 = vrot.slane %v696, 1
    %v698 = vadd.f32 %v696, %v697
    %v699 = vsel %vm663, %v652, 0.0
    %v700 = vrot.slane %v699, 4
    %v701 = vadd.f32 %v699, %v700
    %v702 = vrot.slane %v701, 2
    %v703 = vadd.f32 %v701, %v702
    %v704 = vrot.slane %v703, 1
    %v705 = vadd.f32 %v703, %v704
    %v706 = vsel %vm663, %v653, 0.0
    %v707 = vrot.slane %v706, 4
    %v708 = vadd.f32 %v706, %v707
    %v709 = vrot.slane %v708, 2
    %v710 = vadd.f32 %v708, %v709
    %v711 = vrot.slane %v710, 1
    %v712 = vadd.f32 %v710, %v711
    %v713 = vsel %vm663, %v654, 0.0
    %v714 = vrot.slane %v713, 4
    %v715 = vadd.f32 %v713, %v714
    %v716 = vrot.slane %v715, 2
    %v717 = vadd.f32 %v715, %v716
    %v718 = vrot.slane %v717, 1
    %v719 = vadd.f32 %v717, %v718
    %v720 = vsel %vm663, %v655, 0.0
    %v721 = vrot.slane %v720, 4
    %v722 = vadd.f32 %v720, %v721
    %v723 = vrot.slane %v722, 2
    %v724 = vadd.f32 %v722, %v723
    %v725 = vrot.slane %v724, 1
    %v726 = vadd.f32 %v724, %v725
    %v727 = vsel %vm663, %v656, 0.0
    %v728 = vrot.slane %v727, 4
    %v729 = vadd.f32 %v727, %v728
    %v730 = vrot.slane %v729, 2
    %v731 = vadd.f32 %v729, %v730
    %v732 = vrot.slane %v731, 1
    %v733 = vadd.f32 %v731, %v732
    %v734 = vsel %vm663, %v657, 0.0
    %v735 = vrot.slane %v734, 4
    %v736 = vadd.f32 %v734, %v735
    %v737 = vrot.slane %v736, 2
    %v738 = vadd.f32 %v736, %v737
    %v739 = vrot.slane %v738, 1
    %v740 = vadd.f32 %v738, %v739
    %v741 = vsel %vm663, %v658, 0.0
    %v742 = vrot.slane %v741, 4
    %v743 = vadd.f32 %v741, %v742
    %v744 = vrot.slane %v743, 2
    %v745 = vadd.f32 %v743, %v744
    %v746 = vrot.slane %v745, 1
    %v747 = vadd.f32 %v745, %v746
    %v748 = vsel %vm663, %v659, 0.0
    %v749 = vrot.slane %v748, 4
    %v750 = vadd.f32 %v748, %v749
    %v751 = vrot.slane %v750, 2
    %v752 = vadd.f32 %v750, %v751
    %v753 = vrot.slane %v752, 1
    %v754 = vadd.f32 %v752, %v753
    %v755 = vsel %vm663, %v660, 0.0
    %v756 = vrot.slane %v755, 4
    %v757 = vadd.f32 %v755, %v756
    %v758 = vrot.slane %v757, 2
    %v759 = vadd.f32 %v757, %v758
    %v760 = vrot.slane %v759, 1
    %v761 = vadd.f32 %v759, %v760
    %v762 = vsel %vm663, %v661, 0.0
    %v763 = vrot.slane %v762, 4
    %v764 = vadd.f32 %v762, %v763
    %v765 = vrot.slane %v764, 2
    %v766 = vadd.f32 %v764, %v765
    %v767 = vrot.slane %v766, 1
    %v768 = vadd.f32 %v766, %v767
    %v769 = vsel %vm663, %v662, 0.0
    %v770 = vrot.slane %v769, 4
    %v771 = vadd.f32 %v769, %v770
    %v772 = vrot.slane %v771, 2
    %v773 = vadd.f32 %v771, %v772
    %v774 = vrot.slane %v773, 1
    %v775 = vadd.f32 %v773, %v774
    %v776 = vpack.c.bf16 %v670, %v670
    %v777 = vpack.c.bf16 %v677, %v677
    %v778 = vpack.c.bf16 %v684, %v684
    %v779 = vpack.c.bf16 %v691, %v691
    %v780 = vpack.c.bf16 %v698, %v698
    %v781 = vpack.c.bf16 %v705, %v705
    %v782 = vpack.c.bf16 %v712, %v712
    %v783 = vpack.c.bf16 %v719, %v719
    %v784 = vpack.c.bf16 %v726, %v726
    %v785 = vpack.c.bf16 %v733, %v733
    %v786 = vpack.c.bf16 %v740, %v740
    %v787 = vpack.c.bf16 %v747, %v747
    %v788 = vpack.c.bf16 %v754, %v754
    %v789 = vpack.c.bf16 %v761, %v761
    %v790 = vpack.c.bf16 %v768, %v768
    %v791 = vpack.c.bf16 %v775, %v775
    %v793 = vlaneseq
    %v794 = vshrl.u32 %v793, 7
    %v795 = vsub.s32 0, %v794
    %v796 = vrot.slane %v133, %v795
    %v797 = vlaneseq
    %v798 = vshrl.u32 %v797, 7
    %v799 = vsub.s32 1, %v798
    %v800 = vrot.slane %v133, %v799
    %v819 = vunpack.c.l.b16 %v776
    %v820 = vunpack.c.l.b16 %v777
    %v821 = vunpack.c.l.b16 %v778
    %v822 = vunpack.c.l.b16 %v779
    %v823 = vunpack.c.l.b16 %v780
    %v824 = vunpack.c.l.b16 %v781
    %v825 = vunpack.c.l.b16 %v782
    %v826 = vunpack.c.l.b16 %v783
    %v827 = vunpack.c.l.b16 %v784
    %v828 = vunpack.c.l.b16 %v785
    %v829 = vunpack.c.l.b16 %v786
    %v830 = vunpack.c.l.b16 %v787
    %v831 = vunpack.c.l.b16 %v788
    %v832 = vunpack.c.l.b16 %v789
    %v833 = vunpack.c.l.b16 %v790
    %v834 = vunpack.c.l.b16 %v791
    %vm835 = vcmask 1041409
    %v836 = vsel %vm835, %v820, %v819
    %vm837 = vcmask 1042434
    %v838 = vsel %vm837, %v821, %v836
    %vm839 = vcmask 1043459
    %v840 = vsel %vm839, %v822, %v838
    %vm841 = vcmask 1044484
    %v842 = vsel %vm841, %v823, %v840
    %vm843 = vcmask 1045509
    %v844 = vsel %vm843, %v824, %v842
    %vm845 = vcmask 1046534
    %v846 = vsel %vm845, %v825, %v844
    %vm847 = vcmask 1047559
    %v848 = vsel %vm847, %v826, %v846
    %v849 = vsel %vm835, %v828, %v827
    %v850 = vsel %vm837, %v829, %v849
    %v851 = vsel %vm839, %v830, %v850
    %v852 = vsel %vm841, %v831, %v851
    %v853 = vsel %vm843, %v832, %v852
    %v854 = vsel %vm845, %v833, %v853
    %v855 = vsel %vm847, %v834, %v854
    %v856 = vpack.c.b16 %v855, %v848
    %v865 = vunpack.c.l.b16 %v89
    %v866 = vunpack.c.h.b16 %v89
    %v867 = vunpack.c.l.b16 %v90
    %v868 = vunpack.c.h.b16 %v90
    %v869 = vunpack.c.l.b16 %v91
    %v870 = vunpack.c.h.b16 %v91
    %v871 = vunpack.c.l.b16 %v92
    %v872 = vunpack.c.h.b16 %v92
    %v873 = vunpack.c.l.b16 %v93
    %v874 = vunpack.c.h.b16 %v93
    %v875 = vunpack.c.l.b16 %v94
    %v876 = vunpack.c.h.b16 %v94
    %v877 = vunpack.c.l.b16 %v95
    %v878 = vunpack.c.h.b16 %v95
    %v879 = vunpack.c.l.b16 %v96
    %v880 = vunpack.c.h.b16 %v96
    %v881 = vpack.c.b16 %v867, %v865
    %v882 = vpack.c.b16 %v868, %v866
    %v883 = vpack.c.b16 %v871, %v869
    %v884 = vpack.c.b16 %v872, %v870
    %v885 = vpack.c.b16 %v875, %v873
    %v886 = vpack.c.b16 %v876, %v874
    %v887 = vpack.c.b16 %v879, %v877
    %v888 = vpack.c.b16 %v880, %v878
    %v898 = vsel %vm663, %v856, 0
    %900 = vmatprep.subr.bf16.mxu0 %v882
    %901 = vmatpush1.bf16.msra.mxu0 %v881
    %902 = vmatprep.subr.bf16.mxu0 %v884
    %903 = vmatpush1.bf16.msra.mxu0 %v883
    %904 = vmatprep.subr.bf16.mxu0 %v886
    %905 = vmatpush1.bf16.msra.mxu0 %v885
    %906 = vmatprep.subr.bf16.mxu0 %v888
    %907 = vmatpush1.bf16.msra.mxu0 %v887
    %908 = vmatprep.subr.bf16.mxu0 0
    %909 = vmatpush1.bf16.msra.mxu0 0
    %910 = vmatprep.subr.bf16.mxu0 0
    %911 = vmatpush1.bf16.msra.mxu0 0
    %912 = vmatprep.subr.bf16.mxu0 0
    %913 = vmatpush1.bf16.msra.mxu0 0
    %914 = vmatprep.subr.bf16.mxu0 0
    %915 = vmatpush1.bf16.msra.mxu0 0
    %916 = vmatprep.subr.bf16.mxu0 0
    %917 = vmatpush1.bf16.msra.mxu0 0
    %918 = vmatprep.subr.bf16.mxu0 0
    %919 = vmatpush1.bf16.msra.mxu0 0
    %920 = vmatprep.subr.bf16.mxu0 0
    %921 = vmatpush1.bf16.msra.mxu0 0
    %922 = vmatprep.subr.bf16.mxu0 0
    %923 = vmatpush1.bf16.msra.mxu0 0
    %924 = vmatprep.subr.bf16.mxu0 0
    %925 = vmatpush1.bf16.msra.mxu0 0
    %926 = vmatprep.subr.bf16.mxu0 0
    %927 = vmatpush1.bf16.msra.mxu0 0
    %928 = vmatprep.subr.bf16.mxu0 0
    %929 = vmatpush1.bf16.msra.mxu0 0
    %930 = vmatprep.subr.bf16.mxu0 0
    %931 = vmatpush1.bf16.msra.mxu0 0
    %932 = vmatprep.mubr.bf16.mxu0 0
    %933 = vmatmul.mubr.bf16.gmra.mrb[0].mxu0 %v898
    %v934 = vpop.f32.mrb[0].mxu0
    %v935 = vadd.f32 %v796, %v934
    %v936 = vpop.f32.mrb[0].mxu0
    %v937 = vadd.f32 %v800, %v936
    %v938 = vpop.f32.mrb[0].mxu0
    %v939 = vadd.f32 %v796, %v938
    %v940 = vpop.f32.mrb[0].mxu0
    %v941 = vadd.f32 %v800, %v940
    %942 = vdwg.mxu0
    %v943 = vmax.f32 %v935, 0.0
    %v944 = vmax.f32 %v937, 0.0
    %v945 = vmax.f32 %v939, 0.0
    %v946 = vmax.f32 %v941, 0.0
    %v947 = vpack.c.bf16 %v945, %v943
    %v948 = vpack.c.bf16 %v946, %v944
    %v973 = vunpack.c.l.b16 %v97
    %v974 = vunpack.c.l.b16 %v98
    %v975 = vunpack.c.l.b16 %v99
    %v976 = vunpack.c.l.b16 %v100
    %v977 = vunpack.c.l.b16 %v101
    %v978 = vunpack.c.l.b16 %v102
    %v979 = vunpack.c.l.b16 %v103
    %v980 = vunpack.c.l.b16 %v104
    %v981 = vunpack.c.l.b16 %v105
    %v982 = vunpack.c.l.b16 %v106
    %v983 = vunpack.c.l.b16 %v107
    %v984 = vunpack.c.l.b16 %v108
    %v985 = vunpack.c.l.b16 %v109
    %v986 = vunpack.c.l.b16 %v110
    %v987 = vunpack.c.l.b16 %v111
    %v988 = vunpack.c.l.b16 %v112
    %v989 = vunpack.c.l.b16 %v113
    %v990 = vunpack.c.l.b16 %v114
    %v991 = vunpack.c.l.b16 %v115
    %v992 = vunpack.c.l.b16 %v116
    %v993 = vunpack.c.l.b16 %v117
    %v994 = vunpack.c.l.b16 %v118
    %v995 = vunpack.c.l.b16 %v119
    %v996 = vunpack.c.l.b16 %v120
    %v997 = vpack.c.b16 %v974, %v973
    %v998 = vpack.c.b16 %v976, %v975
    %v999 = vpack.c.b16 %v978, %v977
    %v1000 = vpack.c.b16 %v980, %v979
    %v1001 = vpack.c.b16 %v982, %v981
    %v1002 = vpack.c.b16 %v984, %v983
    %v1003 = vpack.c.b16 %v986, %v985
    %v1004 = vpack.c.b16 %v988, %v987
    %v1005 = vpack.c.b16 %v990, %v989
    %v1006 = vpack.c.b16 %v992, %v991
    %v1007 = vpack.c.b16 %v994, %v993
    %v1008 = vpack.c.b16 %v996, %v995
    %v1022 = vsel %vm663, %v948, 0
    %1024 = vmatprep.subr.bf16.mxu0 0
    %1025 = vmatpush1.bf16.msra.mxu0 %v997
    %1026 = vmatprep.subr.bf16.mxu0 0
    %1027 = vmatpush1.bf16.msra.mxu0 %v998
    %1028 = vmatprep.subr.bf16.mxu0 0
    %1029 = vmatpush1.bf16.msra.mxu0 %v999
    %1030 = vmatprep.subr.bf16.mxu0 0
    %1031 = vmatpush1.bf16.msra.mxu0 %v1000
    %1032 = vmatprep.subr.bf16.mxu0 0
    %1033 = vmatpush1.bf16.msra.mxu0 %v1001
    %1034 = vmatprep.subr.bf16.mxu0 0
    %1035 = vmatpush1.bf16.msra.mxu0 %v1002
    %1036 = vmatprep.subr.bf16.mxu0 0
    %1037 = vmatpush1.bf16.msra.mxu0 %v1003
    %1038 = vmatprep.subr.bf16.mxu0 0
    %1039 = vmatpush1.bf16.msra.mxu0 %v1004
    %1040 = vmatprep.subr.bf16.mxu0 0
    %1041 = vmatpush1.bf16.msra.mxu0 %v1005
    %1042 = vmatprep.subr.bf16.mxu0 0
    %1043 = vmatpush1.bf16.msra.mxu0 %v1006
    %1044 = vmatprep.subr.bf16.mxu0 0
    %1045 = vmatpush1.bf16.msra.mxu0 %v1007
    %1046 = vmatprep.subr.bf16.mxu0 0
    %1047 = vmatpush1.bf16.msra.mxu0 %v1008
    %1048 = vmatprep.subr.bf16.mxu0 0
    %1049 = vmatpush1.bf16.msra.mxu0 0
    %1050 = vmatprep.subr.bf16.mxu0 0
    %1051 = vmatpush1.bf16.msra.mxu0 0
    %1052 = vmatprep.subr.bf16.mxu0 0
    %1053 = vmatpush1.bf16.msra.mxu0 0
    %1054 = vmatprep.subr.bf16.mxu0 0
    %1055 = vmatpush1.bf16.msra.mxu0 0
    %1056 = vmatprep.mubr.bf16.mxu0 %v1022
    %1057 = vmatmul.mubr.bf16.gmra.mrb[0].mxu0 %v947
    %v1058 = vpop.f32.mrb[0].mxu0
    %v1059 = vadd.f32 %v134, %v1058
    %v1060 = vpop.f32.mrb[0].mxu0
    %v1061 = vpop.f32.mrb[0].mxu0
    %v1062 = vadd.f32 %v134, %v1061
    %v1063 = vpop.f32.mrb[0].mxu0
    %1064 = vdwg.mxu0
    %v1065 = vmax.f32 %v1059, 0.0
    %v1066 = vmax.f32 %v1062, 0.0
    %v1067 = vpack.c.bf16 %v1066, %v1065
    %v1076 = vunpack.c.l.b16 %v121
    %v1077 = vunpack.c.l.b16 %v122
    %v1078 = vunpack.c.l.b16 %v123
    %v1079 = vunpack.c.l.b16 %v124
    %v1080 = vunpack.c.l.b16 %v125
    %v1081 = vunpack.c.l.b16 %v126
    %v1082 = vunpack.c.l.b16 %v127
    %v1083 = vunpack.c.l.b16 %v128
    %v1084 = vpack.c.b16 %v1077, %v1076
    %v1085 = vpack.c.b16 %v1079, %v1078
    %v1086 = vpack.c.b16 %v1081, %v1080
    %v1087 = vpack.c.b16 %v1083, %v1082
    %v1093 = vsel %vm663, %v1067, 0
    %1095 = vmatprep.subr.bf16.mxu0 0
    %1096 = vmatpush1.bf16.msra.mxu0 %v1084
    %1097 = vmatprep.subr.bf16.mxu0 0
    %1098 = vmatpush1.bf16.msra.mxu0 %v1085
    %1099 = vmatprep.subr.bf16.mxu0 0
    %1100 = vmatpush1.bf16.msra.mxu0 %v1086
    %1101 = vmatprep.subr.bf16.mxu0 0
    %1102 = vmatpush1.bf16.msra.mxu0 %v1087
    %1103 = vmatprep.subr.bf16.mxu0 0
    %1104 = vmatpush1.bf16.msra.mxu0 0
    %1105 = vmatprep.subr.bf16.mxu0 0
    %1106 = vmatpush1.bf16.msra.mxu0 0
    %1107 = vmatprep.subr.bf16.mxu0 0
    %1108 = vmatpush1.bf16.msra.mxu0 0
    %1109 = vmatprep.subr.bf16.mxu0 0
    %1110 = vmatpush1.bf16.msra.mxu0 0
    %1111 = vmatprep.subr.bf16.mxu0 0
    %1112 = vmatpush1.bf16.msra.mxu0 0
    %1113 = vmatprep.subr.bf16.mxu0 0
    %1114 = vmatpush1.bf16.msra.mxu0 0
    %1115 = vmatprep.subr.bf16.mxu0 0
    %1116 = vmatpush1.bf16.msra.mxu0 0
    %1117 = vmatprep.subr.bf16.mxu0 0
    %1118 = vmatpush1.bf16.msra.mxu0 0
    %1119 = vmatprep.subr.bf16.mxu0 0
    %1120 = vmatpush1.bf16.msra.mxu0 0
    %1121 = vmatprep.subr.bf16.mxu0 0
    %1122 = vmatpush1.bf16.msra.mxu0 0
    %1123 = vmatprep.subr.bf16.mxu0 0
    %1124 = vmatpush1.bf16.msra.mxu0 0
    %1125 = vmatprep.subr.bf16.mxu0 0
    %1126 = vmatpush1.bf16.msra.mxu0 0
    %1127 = vmatprep.mubr.bf16.mxu0 0
    %1128 = vmatmul.mubr.bf16.gmra.mrb[0].mxu0 %v1093
    %v1129 = vpop.f32.mrb[0].mxu0
    %v1130 = vadd.f32 %v135, %v1129
    %v1131 = vpop.f32.mrb[0].mxu0
    %v1132 = vpop.f32.mrb[0].mxu0
    %v1133 = vadd.f32 %v135, %v1132
    %v1134 = vpop.f32.mrb[0].mxu0
    %1135 = vdwg.mxu0
    %v1136 = vmax.f32 %v1130, 0.0
    %v1137 = vmax.f32 %v1133, 0.0
    %v1138 = vpack.c.bf16 %v1137, %v1136
    %v1140 = vunpack.c.l.b16 %v129
    %v1141 = vpack.c.b16 %v1140, %v1140
    %v1143 = vshrl.u32 %v1141, 16
    %vm1145 = vcmask 261120
    %v1147 = vsel %vm1145, %v1143, 0
    %v1150 = vsel %vm1145, %v1138, 0
    %1152 = vmatprep.subr.bf16.mxu0 0
    %1153 = vmatpush1.bf16.xpose.msra.mxu0 %v1150
    %1154 = vmatprep.subr.bf16.mxu0 0
    %1155 = vmatpush1.bf16.xpose.msra.mxu0 0
    %1156 = vmatprep.subr.bf16.mxu0 0
    %1157 = vmatpush1.bf16.xpose.msra.mxu0 0
    %1158 = vmatprep.subr.bf16.mxu0 0
    %1159 = vmatpush1.bf16.xpose.msra.mxu0 0
    %1160 = vmatprep.subr.bf16.mxu0 0
    %1161 = vmatpush1.bf16.xpose.msra.mxu0 0
    %1162 = vmatprep.subr.bf16.mxu0 0
    %1163 = vmatpush1.bf16.xpose.msra.mxu0 0
    %1164 = vmatprep.subr.bf16.mxu0 0
    %1165 = vmatpush1.bf16.xpose.msra.mxu0 0
    %1166 = vmatprep.subr.bf16.mxu0 0
    %1167 = vmatpush1.bf16.xpose.msra.mxu0 0
    %1168 = vmatprep.subr.bf16.mxu0 0
    %1169 = vmatpush1.bf16.xpose.msra.mxu0 0
    %1170 = vmatprep.subr.bf16.mxu0 0
    %1171 = vmatpush1.bf16.xpose.msra.mxu0 0
    %1172 = vmatprep.subr.bf16.mxu0 0
    %1173 = vmatpush1.bf16.xpose.msra.mxu0 0
    %1174 = vmatprep.subr.bf16.mxu0 0
    %1175 = vmatpush1.bf16.xpose.msra.mxu0 0
    %1176 = vmatprep.subr.bf16.mxu0 0
    %1177 = vmatpush1.bf16.xpose.msra.mxu0 0
    %1178 = vmatprep.subr.bf16.mxu0 0
    %1179 = vmatpush1.bf16.xpose.msra.mxu0 0
    %1180 = vmatprep.subr.bf16.mxu0 0
    %1181 = vmatpush1.bf16.xpose.msra.mxu0 0
    %1182 = vmatprep.subr.bf16.mxu0 0
    %1183 = vmatpush1.bf16.xpose.msra.mxu0 0
    %1184 = vmatprep.mubr.bf16.mxu0 0
    %1185 = vmatmul.mubr.bf16.gmra.mrb[0].mxu0 %v1147
    %v1186 = vpop.f32.mrb[0].mxu0
    %v1187 = vadd.f32 0.0, %v1186
    %v1188 = vpop.f32.mrb[0].mxu0
    %v1189 = vpop.f32.mrb[0].mxu0
    %v1190 = vpop.f32.mrb[0].mxu0
    %1191 = vdwg.mxu0
    %v1193 = vsel %vm663, %v129, 0
    %1195 = vmatprep.subr.bf16.mxu0 0
    %1196 = vmatpush1.bf16.xpose.msra.mxu0 %v898
    %1197 = vmatprep.subr.bf16.mxu0 0
    %1198 = vmatpush1.bf16.xpose.msra.mxu0 0
    %1199 = vmatprep.subr.bf16.mxu0 0
    %1200 = vmatpush1.bf16.xpose.msra.mxu0 0
    %1201 = vmatprep.subr.bf16.mxu0 0
    %1202 = vmatpush1.bf16.xpose.msra.mxu0 0
    %1203 = vmatprep.subr.bf16.mxu0 0
    %1204 = vmatpush1.bf16.xpose.msra.mxu0 0
    %1205 = vmatprep.subr.bf16.mxu0 0
    %1206 = vmatpush1.bf16.xpose.msra.mxu0 0
    %1207 = vmatprep.subr.bf16.mxu0 0
    %1208 = vmatpush1.bf16.xpose.msra.mxu0 0
    %1209 = vmatprep.subr.bf16.mxu0 0
    %1210 = vmatpush1.bf16.xpose.msra.mxu0 0
    %1211 = vmatprep.subr.bf16.mxu0 0
    %1212 = vmatpush1.bf16.xpose.msra.mxu0 0
    %1213 = vmatprep.subr.bf16.mxu0 0
    %1214 = vmatpush1.bf16.xpose.msra.mxu0 0
    %1215 = vmatprep.subr.bf16.mxu0 0
    %1216 = vmatpush1.bf16.xpose.msra.mxu0 0
    %1217 = vmatprep.subr.bf16.mxu0 0
    %1218 = vmatpush1.bf16.xpose.msra.mxu0 0
    %1219 = vmatprep.subr.bf16.mxu0 0
    %1220 = vmatpush1.bf16.xpose.msra.mxu0 0
    %1221 = vmatprep.subr.bf16.mxu0 0
    %1222 = vmatpush1.bf16.xpose.msra.mxu0 0
    %1223 = vmatprep.subr.bf16.mxu0 0
    %1224 = vmatpush1.bf16.xpose.msra.mxu0 0
    %1225 = vmatprep.subr.bf16.mxu0 0
    %1226 = vmatpush1.bf16.xpose.msra.mxu0 0
    %1227 = vmatprep.mubr.bf16.mxu0 0
    %1228 = vmatmul.mubr.bf16.gmra.mrb[0].mxu0 %v1193
    %v1229 = vpop.f32.mrb[0].mxu0
    %v1230 = vadd.f32 %v1187, %v1229
    %v1231 = vpop.f32.mrb[0].mxu0
    %v1232 = vpop.f32.mrb[0].mxu0
    %v1233 = vpop.f32.mrb[0].mxu0
    %1234 = vdwg.mxu0
    %1236 = vset.pattern.permute.xlu0 0
    %1237 = vperm.xlu0 %1236, %v136
    %v1238 = vpop.permute.xlu0 %1237
    %v1240 = vadd.f32 %v1230, %v1238
    %vm1241 = vcmask 122880
    %1242 = vst.msk [vmem:[#allocation5] sm:$0x1] %vm1241, %v1240
    // Predicated region
    $region18: #{tpu_custom_call.1} parent=1 // pred_check
      _
    $region19: #{tpu_custom_call.1} parent=1 // pred_check_branch
      %1244 = sbr.rel (0) target = $region21
    $region20: #{tpu_custom_call.1} parent=1 // pred_region
      %s1246 = ssub.s32 16, 16
      %1247 = vsyncadd [#allocation4], %s1246
      %s1249 = sshll.u32 [#allocation5], 4
      %s1250 = int_to_ptr.vmem [resolvable:$true] %s1249
      %1252 = dma.vmem_to_hbm [thread:$0]  %s1250, 16, %s3, [#allocation4]
    $region21: #{tpu_custom_call.1} parent=1 // pred_fallthru
      _
    // Predicated region
    $region22: #{tpu_custom_call.1} parent=1 // pred_check
      _
    $region23: #{tpu_custom_call.1} parent=1 // pred_check_branch
      %1254 = sbr.rel (0) target = $region25
    $region24: #{tpu_custom_call.1} parent=1 // pred_region
      %1255 = dma.done [#allocation4], 16
    $region25: #{tpu_custom_call.1} parent=1 // pred_fallthru
      _
    %1256 = vsyncpa [#allocation3], 1
    %1257 = vsyncpa [#allocation4], 1

</llo_original>
